<compile_context>
chip_gen: v6e
topology: v6e:2x2x1
jax: 0.10.0
libtpu: 0.0.40
codegen_flags: <defaults>
</compile_context>

<pallas_src>
import functools

import jax
import jax.numpy as jnp
from jax.experimental import pallas as pl
from jax.experimental.pallas import tpu as pltpu

_LANE = 128
_SMALL_PROBLEM_BYTES = 1 << 20     # below this, the fused XLA path wins


# ---------------------------------------------------------------------------
# Full-row kernels: one grid step sees (tb, C) rows and emits one lane-dense
# (1, 128) block filled with the partial loss sum of its (valid) rows.
# ---------------------------------------------------------------------------
def _soft_xent_full_kernel(x_ref, t_ref, o_ref, *, n_rows, tb):
    i = pl.program_id(0)
    x = x_ref[...].astype(jnp.float32)               # (tb, C)
    t = t_ref[...].astype(jnp.float32)               # (tb, C)

    m = jnp.max(x, axis=-1, keepdims=True)
    shifted = x - m
    lse = jnp.log(jnp.sum(jnp.exp(shifted), axis=-1, keepdims=True))
    logp = shifted - lse
    row_loss = jnp.sum(-t * logp, axis=-1, keepdims=True)          # (tb, 1)

    # mask tail rows when N is not a multiple of tb (garbage can't leak
    # through a select)
    row_ids = i * tb + jax.lax.broadcasted_iota(jnp.int32, (tb, 1), 0)
    row_loss = jnp.where(row_ids < n_rows, row_loss, 0.0)
    part = jnp.sum(row_loss, axis=0, keepdims=True)                 # (1, 1)
    o_ref[...] = jnp.broadcast_to(part, (1, _LANE))                 # lane-dense


def _hard_xent_full_kernel(x_ref, y_ref, o_ref, *, n_rows, tb):
    """No one-hot is ever materialized in HBM: iota-compare gather in-kernel."""
    i = pl.program_id(0)
    x = x_ref[...].astype(jnp.float32)               # (tb, C)
    y = y_ref[...]                                   # (tb, 1) int32

    m = jnp.max(x, axis=-1, keepdims=True)
    shifted = x - m
    lse = jnp.log(jnp.sum(jnp.exp(shifted), axis=-1, keepdims=True))

    col = jax.lax.broadcasted_iota(jnp.int32, x.shape, 1)
    x_at_y = jnp.sum(jnp.where(col == y, shifted, 0.0), axis=-1, keepdims=True)
    row_loss = lse - x_at_y                          # = -log_softmax(x)[label]

    row_ids = i * tb + jax.lax.broadcasted_iota(jnp.int32, (tb, 1), 0)
    row_loss = jnp.where(row_ids < n_rows, row_loss, 0.0)
    part = jnp.sum(row_loss, axis=0, keepdims=True)
    o_ref[...] = jnp.broadcast_to(part, (1, _LANE))


# ---------------------------------------------------------------------------
# Class-blocked kernels (online log-sum-exp) for vocab-sized C.
# loss_row = (sum_c t_c) * logsumexp(x) - sum_c t_c * x_c, so the carries are
#   m  : running max,            s : running sum exp(x - m) (rescaled),
#   d  : running sum t_c * x_c,  w : running sum t_c (soft path only).
# ---------------------------------------------------------------------------
def _soft_xent_blocked_kernel(x_ref, t_ref, o_ref, m_sc, s_sc, d_sc, w_sc,
                              *, n_rows, n_cols, tb, tc):
    i = pl.program_id(0)
    k = pl.program_id(1)
    nk = pl.num_programs(1)

    @pl.when(k == 0)
    def _():
        m_sc[...] = jnp.full_like(m_sc, -jnp.inf)
        s_sc[...] = jnp.zeros_like(s_sc)
        d_sc[...] = jnp.zeros_like(d_sc)
        w_sc[...] = jnp.zeros_like(w_sc)

    x = x_ref[...].astype(jnp.float32)               # (tb, tc)
    t = t_ref[...].astype(jnp.float32)

    col = k * tc + jax.lax.broadcasted_iota(jnp.int32, x.shape, 1)
    valid = col < n_cols                             # mask padded class columns

    x_m = jnp.where(valid, x, -jnp.inf)
    m_new = jnp.maximum(m_sc[...], jnp.max(x_m, axis=-1, keepdims=True))
    s_sc[...] = (s_sc[...] * jnp.exp(m_sc[...] - m_new)
                 + jnp.sum(jnp.where(valid, jnp.exp(x - m_new), 0.0),
                           axis=-1, keepdims=True))
    m_sc[...] = m_new
    d_sc[...] += jnp.sum(jnp.where(valid, t * x, 0.0), axis=-1, keepdims=True)
    w_sc[...] += jnp.sum(jnp.where(valid, t, 0.0), axis=-1, keepdims=True)

    @pl.when(k == nk - 1)
    def _():
        lse_full = m_sc[...] + jnp.log(s_sc[...])                 # logsumexp(x)
        row_loss = w_sc[...] * lse_full - d_sc[...]
        row_ids = i * tb + jax.lax.broadcasted_iota(jnp.int32, (tb, 1), 0)
        row_loss = jnp.where(row_ids < n_rows, row_loss, 0.0)
        part = jnp.sum(row_loss, axis=0, keepdims=True)
        o_ref[...] = jnp.broadcast_to(part, (1, _LANE))


def _hard_xent_blocked_kernel(x_ref, y_ref, o_ref, m_sc, s_sc, d_sc,
                              *, n_rows, n_cols, tb, tc):
    i = pl.program_id(0)
    k = pl.program_id(1)
    nk = pl.num_programs(1)

    @pl.when(k == 0)
    def _():
        m_sc[...] = jnp.full_like(m_sc, -jnp.inf)
        s_sc[...] = jnp.zeros_like(s_sc)
        d_sc[...] = jnp.zeros_like(d_sc)

    x = x_ref[...].astype(jnp.float32)               # (tb, tc)
    y = y_ref[...]                                   # (tb, 1) int32

    col = k * tc + jax.lax.broadcasted_iota(jnp.int32, x.shape, 1)
    valid = col < n_cols

    x_m = jnp.where(valid, x, -jnp.inf)
    m_new = jnp.maximum(m_sc[...], jnp.max(x_m, axis=-1, keepdims=True))
    s_sc[...] = (s_sc[...] * jnp.exp(m_sc[...] - m_new)
                 + jnp.sum(jnp.where(valid, jnp.exp(x - m_new), 0.0),
                           axis=-1, keepdims=True))
    m_sc[...] = m_new
    d_sc[...] += jnp.sum(jnp.where((col == y) & valid, x, 0.0),
                         axis=-1, keepdims=True)

    @pl.when(k == nk - 1)
    def _():
        lse_full = m_sc[...] + jnp.log(s_sc[...])
        row_loss = lse_full - d_sc[...]
        row_ids = i * tb + jax.lax.broadcasted_iota(jnp.int32, (tb, 1), 0)
        row_loss = jnp.where(row_ids < n_rows, row_loss, 0.0)
        part = jnp.sum(row_loss, axis=0, keepdims=True)
        o_ref[...] = jnp.broadcast_to(part, (1, _LANE))


# ---------------------------------------------------------------------------
# Tile / budget selection
# ---------------------------------------------------------------------------
def _vmem_limit_bytes():
    """Generation-aware scoped VMEM budget (half of physical, capped)."""
    try:
        cap = pltpu.get_tpu_info().vmem_capacity_bytes
    except Exception:
        cap = 64 * 1024 * 1024                       # conservative (v7x) fallback
    return min(int(cap * 0.5), 100 * 1024 * 1024)


def _sublane_multiple(*dtypes):
    """Minimum sublane tile: 8 for 4-byte, 16 for 2-byte, 32 for 1-byte."""
    return max(max(8, 32 // jnp.dtype(d).itemsize) for d in dtypes)


def _round_down(v, m):
    return (v // m) * m


def _round_up(v, m):
    return -(-v // m) * m


def _pick_full_row_tb(n, c, x_bytes, t_bytes, hard, sub, budget):
    """Largest row tile whose double-buffered inputs fit; None -> class-block."""
    per_row = 2 * c * x_bytes                        # logits, 2 pipeline buffers
    if hard:
        per_row += 2 * _LANE * 4                     # lane-padded (tb, 1) labels
    else:
        per_row += 2 * c * t_bytes                   # soft targets
    tb = budget // per_row
    if tb < 2 * sub:
        return None                                  # rows too fat: class-block
    tb = min(tb, 8192)                               # >= ~2 MB per grid step
    if tb >= n:
        # Give v7x's two TensorCores at least one block each when the batch is
        # big enough that splitting is worth one extra ~0.35 us grid step.
        if n >= 256 and n >= 4 * sub:
            return min(n, _round_up(_round_up(n, 2) // 2, sub))
        return n
    return max(sub, _round_down(tb, sub))


def _pick_blocked_tiles(n, c, x_bytes, t_bytes, hard, sub, budget):
    """Row tile and class tile for the online-LSE path."""
    tb = n if n <= 256 else 256                      # 256 is a multiple of 8/16/32
    fixed = 3 * tb * _LANE * 4                       # lane-padded f32 carries
    if hard:
        fixed += 2 * tb * _LANE * 4                  # double-buffered label block
    else:
        fixed += tb * _LANE * 4                      # extra target-mass carry
    fixed += 2 * _LANE * 4                           # (1, 128) output buffers
    per_col = 2 * tb * x_bytes + (0 if hard else 2 * tb * t_bytes)
    tc = max(budget - fixed, per_col * _LANE) // per_col
    tc = max(_LANE, min(_round_down(tc, _LANE), 4096))
    if tc >= c:
        tc = c
    return tb, tc


# ---------------------------------------------------------------------------
# Public entry point
# ---------------------------------------------------------------------------
def _xla_cross_entropy(logits, target, size_average=True):
    """Fused XLA path: reference and small-problem fallback."""
    if target.ndim == 1:
        target = jax.nn.one_hot(target, num_classes=logits.shape[-1],
                                dtype=jnp.float32)
    logp = jax.nn.log_softmax(logits.astype(jnp.float32), axis=1)
    per_row = jnp.sum(-target.astype(jnp.float32) * logp, axis=1)
    return jnp.mean(per_row) if size_average else jnp.sum(per_row)


def cutmix_cross_entropy_loss(logits, target, size_average=True, *,
                              tb=None, tc=None,
                              soft_targets_bf16=False,
                              min_pallas_bytes=_SMALL_PROBLEM_BYTES,
                              force_class_blocked=False):
    """JAX/Pallas equivalent of CutMixCrossEntropyLoss.forward.

    logits: (N, C) float array.
    target: (N,) int class indices OR (N, C) soft targets.
    Returns a scalar float32 loss (mean over rows if size_average else sum).
    Note: like the reference CutMix use, out-of-range hard labels are not
    checked and there is no ignore_index.
    """
    n, c = logits.shape
    hard = target.ndim == 1
    if hard:
        assert target.shape == (n,)
    else:
        assert target.shape == (n, c)

    # Small-problem fallback: launch + DMA setup dominates, XLA fuses this.
    if n * c * logits.dtype.itemsize < min_pallas_bytes:
        return _xla_cross_entropy(logits, target, size_average)

    # Optional HBM-traffic cut (targets are probabilities in [0, 1] and the
    # kernel accumulates in f32 regardless).  Opt-in: numerics change ~1e-3.
    if (not hard) and soft_targets_bf16 and target.dtype.itemsize > 2:
        target = target.astype(jnp.bfloat16)

    x_bytes = logits.dtype.itemsize
    t_bytes = 4 if hard else target.dtype.itemsize
    sub = _sublane_multiple(logits.dtype, jnp.int32 if hard else target.dtype)

    vmem_limit = _vmem_limit_bytes()
    budget = int(vmem_limit * 0.7)                   # headroom over the accounting

    use_blocked = force_class_blocked
    if not use_blocked:
        auto_tb = _pick_full_row_tb(n, c, x_bytes, t_bytes, hard, sub, budget)
        if tb is None:
            if auto_tb is None:
                use_blocked = True                   # full rows don't fit VMEM
            else:
                tb = auto_tb

    if use_blocked:
        if tb is None or tc is None:
            auto_tb, auto_tc = _pick_blocked_tiles(n, c, x_bytes, t_bytes,
                                                   hard, sub, budget)
            tb = auto_tb if tb is None else tb
            tc = auto_tc if tc is None else tc
        tb = min(tb, n)
        tc = min(tc, c)
        if tb < n:
            assert tb % sub == 0, f"row tile must be a multiple of {sub}"
        if tc < c:
            assert tc % _LANE == 0, "class tile must be a multiple of 128"
        nb = pl.cdiv(n, tb)
        grid = (nb, pl.cdiv(c, tc))
        out_shape = jax.ShapeDtypeStruct((1, nb * _LANE), jnp.float32)
        out_spec = pl.BlockSpec((1, _LANE), lambda i, k: (0, i))
        x_spec = pl.BlockSpec((tb, tc), lambda i, k: (i, k))
        cparams = pltpu.CompilerParams(
            dimension_semantics=("parallel", "arbitrary"),
            vmem_limit_bytes=vmem_limit)
        carry = pltpu.VMEM((tb, 1), jnp.float32)
        if hard:
            y = target.astype(jnp.int32).reshape(n, 1)
            kernel = functools.partial(_hard_xent_blocked_kernel,
                                       n_rows=n, n_cols=c, tb=tb, tc=tc)
            part = pl.pallas_call(
                kernel, out_shape=out_shape, grid=grid,
                in_specs=[x_spec, pl.BlockSpec((tb, 1), lambda i, k: (i, 0))],
                out_specs=out_spec,
                scratch_shapes=[carry] * 3,
                compiler_params=cparams,
            )(logits, y)
        else:
            kernel = functools.partial(_soft_xent_blocked_kernel,
                                       n_rows=n, n_cols=c, tb=tb, tc=tc)
            part = pl.pallas_call(
                kernel, out_shape=out_shape, grid=grid,
                in_specs=[x_spec, pl.BlockSpec((tb, tc), lambda i, k: (i, k))],
                out_specs=out_spec,
                scratch_shapes=[carry] * 4,
                compiler_params=cparams,
            )(logits, target)
    else:
        tb = min(tb, n)
        if tb < n:
            assert tb % sub == 0, f"row tile must be a multiple of {sub}"
        nb = pl.cdiv(n, tb)
        grid = (nb,)
        out_shape = jax.ShapeDtypeStruct((1, nb * _LANE), jnp.float32)
        out_spec = pl.BlockSpec((1, _LANE), lambda i: (0, i))
        x_spec = pl.BlockSpec((tb, c), lambda i: (i, 0))
        cparams = pltpu.CompilerParams(
            dimension_semantics=("parallel",),
            vmem_limit_bytes=vmem_limit)
        if hard:
            y = target.astype(jnp.int32).reshape(n, 1)
            kernel = functools.partial(_hard_xent_full_kernel, n_rows=n, tb=tb)
            part = pl.pallas_call(
                kernel, out_shape=out_shape, grid=grid,
                in_specs=[x_spec, pl.BlockSpec((tb, 1), lambda i: (i, 0))],
                out_specs=out_spec,
                compiler_params=cparams,
            )(logits, y)
        else:
            kernel = functools.partial(_soft_xent_full_kernel, n_rows=n, tb=tb)
            part = pl.pallas_call(
                kernel, out_shape=out_shape, grid=grid,
                in_specs=[x_spec, pl.BlockSpec((tb, c), lambda i: (i, 0))],
                out_specs=out_spec,
                compiler_params=cparams,
            )(logits, target)

    # Each (1, 128) output block holds its partial sum broadcast across lanes.
    total = jnp.sum(part.reshape(nb, _LANE)[:, 0])
    return total / jnp.float32(n) if size_average else total


if __name__ == "__main__":
    key = jax.random.PRNGKey(0)
    k1, k2, k3 = jax.random.split(key, 3)

    # --- small shapes consistent with the module: batch=16, 32 classes ------
    N, C = 16, 32
    logits = jax.random.normal(k1, (N, C), dtype=jnp.float32)
    raw = jax.random.uniform(k2, (N, C), dtype=jnp.float32)
    soft = raw / jnp.sum(raw, axis=1, keepdims=True)
    hardt = jax.random.randint(k3, (N,), 0, C)

    # Pallas path forced (min_pallas_bytes=0); default would take the fused
    # XLA small-problem fallback (also exercised below).
    l1 = jax.block_until_ready(cutmix_cross_entropy_loss(
        logits, soft, True, min_pallas_bytes=0))
    l2 = jax.block_until_ready(cutmix_cross_entropy_loss(
        logits, hardt, True, min_pallas_bytes=0))
    l3 = jax.block_until_ready(cutmix_cross_entropy_loss(
        logits, soft, False, min_pallas_bytes=0))
    l4 = jax.block_until_ready(cutmix_cross_entropy_loss(
        logits, hardt, False))                      # small-problem fallback
    assert jnp.allclose(l1, _xla_cross_entropy(logits, soft, True),
                        rtol=1e-4, atol=1e-4)
    assert jnp.allclose(l2, _xla_cross_entropy(logits, hardt, True),
                        rtol=1e-4, atol=1e-4)
    assert jnp.allclose(l3, _xla_cross_entropy(logits, soft, False),
                        rtol=1e-4, atol=1e-4)
    assert jnp.allclose(l4, _xla_cross_entropy(logits, hardt, False),
                        rtol=1e-4, atol=1e-4)

    # --- ragged batch (N % tb != 0) on the full-row path ---------------------
    N2, C2 = 20, 32
    logits2 = jax.random.normal(k1, (N2, C2), dtype=jnp.float32)
    raw2 = jax.random.uniform(k2, (N2, C2), dtype=jnp.float32)
    soft2 = raw2 / jnp.sum(raw2, axis=1, keepdims=True)
    hard2 = jax.random.randint(k3, (N2,), 0, C2)
    l5 = jax.block_until_ready(cutmix_cross_entropy_loss(
        logits2, soft2, True, tb=8, min_pallas_bytes=0))
    l6 = jax.block_until_ready(cutmix_cross_entropy_loss(
        logits2, hard2, False, tb=8, min_pallas_bytes=0))
    assert jnp.allclose(l5, _xla_cross_entropy(logits2, soft2, True),
                        rtol=1e-4, atol=1e-4)
    assert jnp.allclose(l6, _xla_cross_entropy(logits2, hard2, False),
                        rtol=1e-4, atol=1e-4)

    # --- class-blocked online-LSE path (row AND column tail masking) ---------
    N3, C3 = 20, 200
    logits3 = jax.random.normal(k1, (N3, C3), dtype=jnp.float32)
    raw3 = jax.random.uniform(k2, (N3, C3), dtype=jnp.float32)
    soft3 = raw3 / jnp.sum(raw3, axis=1, keepdims=True)
    hard3 = jax.random.randint(k3, (N3,), 0, C3)
    l7 = jax.block_until_ready(cutmix_cross_entropy_loss(
        logits3, soft3, True, tb=8, tc=128, min_pallas_bytes=0,
        force_class_blocked=True))
    l8 = jax.block_until_ready(cutmix_cross_entropy_loss(
        logits3, hard3, False, tb=8, tc=128, min_pallas_bytes=0,
        force_class_blocked=True))
    assert jnp.allclose(l7, _xla_cross_entropy(logits3, soft3, True),
                        rtol=1e-4, atol=1e-4)
    assert jnp.allclose(l8, _xla_cross_entropy(logits3, hard3, False),
                        rtol=1e-4, atol=1e-4)

    # --- opt-in bf16 soft targets (HBM traffic cut; looser tolerance) --------
    l9 = jax.block_until_ready(cutmix_cross_entropy_loss(
        logits, soft, True, min_pallas_bytes=0, soft_targets_bf16=True))
    assert jnp.allclose(l9, _xla_cross_entropy(logits, soft, True),
                        rtol=2e-2, atol=2e-2)

    print("KERNEL_OK")
</pallas_src>

<mosaic_0001>
module attributes {stable_mosaic.version = 11 : i64} {
  func.func @_soft_xent_full_kernel(%arg0: i32, %arg1: memref<16x32xf32, #tpu.memory_space<vmem>>, %arg2: memref<16x32xf32, #tpu.memory_space<vmem>>, %arg3: memref<1x128xf32, #tpu.memory_space<vmem>>) attributes {dimension_semantics = [#tpu.dimension_semantics<parallel>], iteration_bounds = array<i64: 1>, scalar_prefetch = 0 : i64, scratch_operands = 0 : i64, tpu.core_type = #tpu.core_type<tc>, window_params = [{transform_indices = @transform_0, window_bounds = array<i64: 16, 32>}, {transform_indices = @transform_1, window_bounds = array<i64: 16, 32>}, {transform_indices = @transform_2, window_bounds = array<i64: 1, 128>}]} {
    %c0 = arith.constant 0 : index
    %c0_0 = arith.constant 0 : index
    %0 = vector.load %arg1[%c0, %c0_0] : memref<16x32xf32, #tpu.memory_space<vmem>>, vector<16x32xf32>
    %c0_1 = arith.constant 0 : index
    %c0_2 = arith.constant 0 : index
    %1 = vector.load %arg2[%c0_1, %c0_2] : memref<16x32xf32, #tpu.memory_space<vmem>>, vector<16x32xf32>
    %cst = arith.constant dense<0xFF800000> : vector<16xf32>
    %2 = vector.multi_reduction <maximumf>, %0, %cst [1] : vector<16x32xf32> to vector<16xf32>
    %3 = vector.shape_cast %2 : vector<16xf32> to vector<16x1xf32>
    %4 = vector.broadcast %3 : vector<16x1xf32> to vector<16x32xf32>
    %5 = arith.subf %0, %4 : vector<16x32xf32>
    %6 = math.exp %5 : vector<16x32xf32>
    %cst_3 = arith.constant dense<0.000000e+00> : vector<16xf32>
    %7 = vector.multi_reduction <add>, %6, %cst_3 [1] : vector<16x32xf32> to vector<16xf32>
    %8 = vector.shape_cast %7 : vector<16xf32> to vector<16x1xf32>
    %9 = math.log %8 : vector<16x1xf32>
    %10 = vector.broadcast %9 : vector<16x1xf32> to vector<16x32xf32>
    %11 = arith.subf %5, %10 : vector<16x32xf32>
    %cst_4 = arith.constant 0.000000e+00 : f32
    %12 = vector.broadcast %cst_4 : f32 to vector<16x32xf32>
    %13 = arith.subf %12, %1 : vector<16x32xf32>
    %14 = arith.mulf %13, %11 : vector<16x32xf32>
    %cst_5 = arith.constant dense<0.000000e+00> : vector<16xf32>
    %15 = vector.multi_reduction <add>, %14, %cst_5 [1] : vector<16x32xf32> to vector<16xf32>
    %16 = vector.shape_cast %15 : vector<16xf32> to vector<16x1xf32>
    %c16_i32 = arith.constant 16 : i32
    %17 = arith.muli %arg0, %c16_i32 : i32
    %18 = tpu.iota {dimensions = array<i32: 0>} : vector<16x1xi32>
    %19 = vector.broadcast %17 : i32 to vector<16x1xi32>
    %20 = arith.addi %19, %18 : vector<16x1xi32>
    %c16_i32_6 = arith.constant 16 : i32
    %21 = vector.broadcast %c16_i32_6 : i32 to vector<16x1xi32>
    %22 = arith.cmpi slt, %20, %21 : vector<16x1xi32>
    %cst_7 = arith.constant 0.000000e+00 : f32
    %23 = vector.broadcast %cst_7 : f32 to vector<16x1xf32>
    %24 = arith.select %22, %16, %23 : vector<16x1xi1>, vector<16x1xf32>
    %cst_8 = arith.constant dense<0.000000e+00> : vector<1xf32>
    %25 = vector.multi_reduction <add>, %24, %cst_8 [0] : vector<16x1xf32> to vector<1xf32>
    %26 = vector.shape_cast %25 : vector<1xf32> to vector<1x1xf32>
    %27 = vector.shape_cast %26 : vector<1x1xf32> to vector<1x1xf32>
    %28 = vector.broadcast %27 : vector<1x1xf32> to vector<1x128xf32>
    %c0_9 = arith.constant 0 : index
    %c0_10 = arith.constant 0 : index
    %29 = vector.load %arg3[%c0_9, %c0_10] : memref<1x128xf32, #tpu.memory_space<vmem>>, vector<1x128xf32>
    tpu.vector_store %arg3[%c0_9, %c0_10], %28 {strides = array<i32>} : memref<1x128xf32, #tpu.memory_space<vmem>>, vector<1x128xf32>,
    return
  }
  func.func @transform_0(%arg0: i32) -> (i32, i32) {
    %c0_i32 = arith.constant 0 : i32
    %c0_i32_0 = arith.constant 0 : i32
    return %arg0, %c0_i32 : i32, i32
  }
  func.func @transform_1(%arg0: i32) -> (i32, i32) {
    %c0_i32 = arith.constant 0 : i32
    %c0_i32_0 = arith.constant 0 : i32
    return %arg0, %c0_i32 : i32, i32
  }
  func.func @transform_2(%arg0: i32) -> (i32, i32) {
    %c0_i32 = arith.constant 0 : i32
    %c0_i32_0 = arith.constant 0 : i32
    return %c0_i32, %arg0 : i32, i32
  }
}

</mosaic_0001>

<llo_original>
// kernel: tpu_custom_call.1
$region0: #{tpu_custom_call.1}
  #allocation0 [shape = 'u32[]', space=smem, size = 0x4, offset = 0x4, fixed_abs, tag = 'smem constant byte address 0x4 - core index']
  #allocation1 [shape = 'u32[144,128]{1,0:T(1,128)}', space=vmem, size = 0x12000, scoped, tag = 'internal scratch']
  %s0 = inlined_call_operand.hbm [shape: f32[16,32], index: 0, kind: input, shape index: {}]
  %s1 = inlined_call_operand.hbm [shape: f32[16,32], index: 1, kind: input, shape index: {}]
  %s2 = inlined_call_operand.hbm [shape: f32[1,128], index: 2, kind: output, shape index: {}]
  %s3 = sld [smem:[#allocation0]]
  $region26: #{tpu_custom_call.1} parent=0
    _
  %s5 = ssub.s32 1, %s3
  %s6 = scalar_select 0, %s5, %s3
  $region1: #{tpu_custom_call.1} parent=0
    #allocation2 [shape = 'u8[8192]{0}', space=vmem, size = 0x2000, scoped, tag = 'input window, operand 0, single buffered']
    #allocation3 [shape = 's32[1]{0}', space=sflag, size = 0x4, scoped, tag = 'scoped memory for tpu_custom_call.1']
    #allocation4 [shape = 's32[1]{0}', space=sflag, size = 0x4, scoped, tag = 'scoped memory for tpu_custom_call.1']
    #allocation5 [shape = 'u8[8192]{0}', space=vmem, size = 0x2000, scoped, tag = 'input window, operand 1, single buffered']
    #allocation6 [shape = 's32[1]{0}', space=sflag, size = 0x4, scoped, tag = 'scoped memory for tpu_custom_call.1']
    #allocation7 [shape = 'u8[512]{0}', space=vmem, size = 0x400, scoped, tag = 'output window, operand 0, single buffered']
    %7 = vsyncpa [#allocation3], 0
    %8 = vsyncpa [#allocation6], 0
    %9 = vsyncpa [#allocation4], 0
    // Predicated region
    $region2: #{tpu_custom_call.1} parent=1 // pred_check
      _
    $region3: #{tpu_custom_call.1} parent=1 // pred_check_branch
      %11 = sbr.rel (0) target = $region5
    $region4: #{tpu_custom_call.1} parent=1 // pred_region
      %s13 = ssub.s32 256, 256
      %14 = vsyncadd [#allocation3], %s13
      %s15 = sshll.u32 [#allocation2], 4
      %s16 = int_to_ptr.vmem [resolvable:$true] %s15
      %21 = dma.hbm_to_vmem [thread:$0]  %s0, 256, %s16, [#allocation3], 128, 128, 8
    $region5: #{tpu_custom_call.1} parent=1 // pred_fallthru
      _
    // Predicated region
    $region6: #{tpu_custom_call.1} parent=1 // pred_check
      _
    $region7: #{tpu_custom_call.1} parent=1 // pred_check_branch
      %23 = sbr.rel (0) target = $region9
    $region8: #{tpu_custom_call.1} parent=1 // pred_region
      %s25 = ssub.s32 256, 256
      %26 = vsyncadd [#allocation6], %s25
      %s27 = sshll.u32 [#allocation5], 4
      %s28 = int_to_ptr.vmem [resolvable:$true] %s27
      %33 = dma.hbm_to_vmem [thread:$0]  %s1, 256, %s28, [#allocation6], 128, 128, 8
    $region9: #{tpu_custom_call.1} parent=1 // pred_fallthru
      _
    // Predicated region
    $region10: #{tpu_custom_call.1} parent=1 // pred_check
      _
    $region11: #{tpu_custom_call.1} parent=1 // pred_check_branch
      %35 = sbr.rel (0) target = $region13
    $region12: #{tpu_custom_call.1} parent=1 // pred_region
      %36 = dma.done [#allocation3], 256
    $region13: #{tpu_custom_call.1} parent=1 // pred_fallthru
      _
    // Predicated region
    $region14: #{tpu_custom_call.1} parent=1 // pred_check
      _
    $region15: #{tpu_custom_call.1} parent=1 // pred_check_branch
      %38 = sbr.rel (0) target = $region17
    $region16: #{tpu_custom_call.1} parent=1 // pred_region
      %39 = dma.done [#allocation6], 256
    $region17: #{tpu_custom_call.1} parent=1 // pred_fallthru
      _
    %v40 = vld [vmem:[#allocation2] sm:$0xff]
    %v41 = vld [vmem:[#allocation2 + $0x8] sm:$0xff]
    %v42 = vld [vmem:[#allocation5] sm:$0xff]
    %v43 = vld [vmem:[#allocation5 + $0x8] sm:$0xff]
    %vm44 = vcmask 261120
    %v45 = vsel %vm44, %v40, -inf
    %46 = vmax.xlane.f32.xlu0 %v45
    %v47 = vpop.xlane.xlu0 %46
    %v48 = vsel %vm44, %v41, -inf
    %49 = vmax.xlane.f32.xlu0 %v48
    %v50 = vpop.xlane.xlu0 %49
    %v51 = vsub.f32 %v40, %v47
    %v52 = vsub.f32 %v41, %v50
    %v53 = vmul.f32 %v51, 1.442695
    %v54 = vpow.pop %v53
    %v55 = vmul.f32 %v52, 1.442695
    %v56 = vpow.pop %v55
    %v57 = vsel %vm44, %v54, 0.0
    %58 = vadd.xlane.f32.xlu0 %v57
    %v59 = vpop.xlane.xlu0 %58
    %v60 = vsel %vm44, %v56, 0.0
    %61 = vadd.xlane.f32.xlu0 %v60
    %v62 = vpop.xlane.xlu0 %61
    %v63 = vlog2.pop %v59
    %v64 = vmul.f32 %v63, 0.6931472
    %v65 = vlog2.pop %v62
    %v66 = vmul.f32 %v65, 0.6931472
    %v67 = vsub.f32 %v51, %v64
    %v68 = vsub.f32 %v52, %v66
    %v69 = vsub.f32 0.0, %v42
    %v70 = vsub.f32 0.0, %v43
    %v71 = vmul.f32 %v69, %v67
    %v72 = vmul.f32 %v70, %v68
    %v73 = vsel %vm44, %v71, 0.0
    %74 = vadd.xlane.f32.xlu0 %v73
    %v75 = vpop.xlane.xlu0 %74
    %v76 = vsel %vm44, %v72, 0.0
    %77 = vadd.xlane.f32.xlu0 %v76
    %v78 = vpop.xlane.xlu0 %77
    %s79 = smul.u32 0, 16
    %v80 = vlaneseq
    %v81 = vshrl.u32 %v80, 7
    %v82 = vadd.s32 %v81, 8
    %v83 = vstv %s79
    %v84 = vadd.s32 %v83, %v81
    %v85 = vadd.s32 %v83, %v82
    %vm86 = vcmp.lt.s32.totalorder %v84, 16
    %vm87 = vcmp.lt.s32.totalorder %v85, 16
    %v88 = vsel %vm86, %v75, 0.0
    %v89 = vsel %vm87, %v78, 0.0
    %v90 = vadd.f32 %v88, %v89
    %v91 = vrot.slane %v90, 4
    %v92 = vadd.f32 %v90, %v91
    %v93 = vrot.slane %v92, 2
    %v94 = vadd.f32 %v92, %v93
    %v95 = vrot.slane %v94, 1
    %v96 = vadd.f32 %v94, %v95
    %97 = vst [vmem:[#allocation7] sm:$0x1] %v96
    // Predicated region
    $region18: #{tpu_custom_call.1} parent=1 // pred_check
      _
    $region19: #{tpu_custom_call.1} parent=1 // pred_check_branch
      %99 = sbr.rel (0) target = $region21
    $region20: #{tpu_custom_call.1} parent=1 // pred_region
      %s101 = ssub.s32 16, 16
      %102 = vsyncadd [#allocation4], %s101
      %s104 = sshll.u32 [#allocation7], 4
      %s105 = int_to_ptr.vmem [resolvable:$true] %s104
      %107 = dma.vmem_to_hbm [thread:$0]  %s105, 16, %s2, [#allocation4]
    $region21: #{tpu_custom_call.1} parent=1 // pred_fallthru
      _
    // Predicated region
    $region22: #{tpu_custom_call.1} parent=1 // pred_check
      _
    $region23: #{tpu_custom_call.1} parent=1 // pred_check_branch
      %109 = sbr.rel (0) target = $region25
    $region24: #{tpu_custom_call.1} parent=1 // pred_region
      %110 = dma.done [#allocation4], 16
    $region25: #{tpu_custom_call.1} parent=1 // pred_fallthru
      _
    %111 = vsyncpa [#allocation3], 1
    %112 = vsyncpa [#allocation6], 1
    %113 = vsyncpa [#allocation4], 1

</llo_original>
